<compile_context>
chip_gen: v5e
topology: v5e:2x2
jax: 0.10.0
libtpu: 0.0.40
codegen_flags: <defaults>
</compile_context>

<pallas_src>
import functools

import jax
import jax.numpy as jnp
from jax.experimental import pallas as pl
from jax.experimental.pallas import tpu as pltpu

_LANE = 128                       # weight feature dims padded to multiples of this
_SUBLANE = 16                     # batch-tile granularity (bf16 sublane packing)
_VMEM_LIMIT = 32 * 1024 * 1024    # explicit scoped-VMEM request (safe on v5e/v6e/v7x)
_VMEM_BUDGET = 24 * 1024 * 1024   # budget tile selection is allowed to consume


def _round_up(x, m):
    return ((x + m - 1) // m) * m


def _encoder_kernel(x_ref, w1_ref, b1_ref, w2_ref, b2_ref, o_ref):
    # Layer 1: cast the f32 input tile to bf16 (MXU operand dtype) in-kernel —
    # the wrapper never materializes a padded/cast copy of x in HBM.  K = D_in
    # may be < 128; Mosaic pads it internally on the MXU.
    xb = x_ref[...].astype(jnp.bfloat16)
    h = jnp.dot(xb, w1_ref[...], preferred_element_type=jnp.float32)
    h = jnp.maximum(h + b1_ref[...], 0.0)
    # Layer 2: bf16 operand, f32 accumulate; no VMEM round-trip for h — Mosaic
    # spills only what it must and can interleave the two matmuls per sub-tile.
    o = jnp.dot(h.astype(jnp.bfloat16), w2_ref[...],
                preferred_element_type=jnp.float32)
    o = jnp.maximum(o + b2_ref[...], 0.0)
    # o has h_p (lane-padded) columns; the output block carries only the real H
    # columns (the slice is a no-op when H is already a multiple of 128).
    o_ref[...] = o[:, : o_ref.shape[-1]].astype(o_ref.dtype)


def _pick_tile_b(batch, d_in, h_p):
    """Batch-tile rows: VMEM-budgeted, MXU/sublane aligned, no pointless splits."""
    # Bytes per batch row resident in VMEM: double-buffered f32 x block,
    # double-buffered f32 out block, plus headroom for the layer-1 activation
    # (f32 + bf16 copy) living in vregs / compiler scratch.
    per_row = 2 * d_in * 4 + 2 * h_p * 4 + h_p * 6
    # Weight/bias blocks (constant index_map) are double-buffered by default.
    # (pipeline_mode=pl.Buffered(1) on them would halve this; it only matters
    #  once hidden_dim grows well past 256, so it is left at the default here.)
    fixed = 2 * ((d_in + h_p) * h_p * 2 + 2 * h_p * 4)
    avail = max(_VMEM_BUDGET - fixed, per_row * _SUBLANE)
    tile = min(avail // per_row, 1024)
    if tile >= 256:
        tile = (tile // 256) * 256   # MXU M-granule on v6e/v7x (128-aligned for v5e too)
    else:
        tile = max((tile // _SUBLANE) * _SUBLANE, _SUBLANE)

    b_r = _round_up(batch, _SUBLANE)
    if tile < b_r:
        return tile                  # large batch: several full-size tiles
    # Whole batch fits in one tile.  Split into two balanced grid steps only
    # when each half is still a solid MXU-sized tile (>= 256 rows): that feeds
    # both v7x TensorCores, while on single-TC v5e/v6e a small-batch split only
    # adds ~0.35 us/step grid overhead and shrinks the MXU M dimension.
    if b_r >= 512:
        return _round_up((b_r + 1) // 2, _SUBLANE)
    return b_r


def prepare_params(w1, b1, w2, b2):
    """Pad weight feature dims to lane-dense multiples of 128 and cast the MXU
    operands to bf16.  Weights are static across forward calls, so this runs
    once at parameter setup instead of on every call (hoisted per perf review)."""
    d_in, h = w1.shape
    assert w2.shape == (h, h) and b1.shape == (h,) and b2.shape == (h,)
    h_p = _round_up(h, _LANE)
    w1_p = jnp.pad(w1, ((0, 0), (0, h_p - h))).astype(jnp.bfloat16)
    w2_p = jnp.pad(w2, ((0, h_p - h), (0, h_p - h))).astype(jnp.bfloat16)
    b1_p = jnp.pad(b1.astype(jnp.float32), (0, h_p - h)).reshape(1, h_p)
    b2_p = jnp.pad(b2.astype(jnp.float32), (0, h_p - h)).reshape(1, h_p)
    return w1_p, b1_p, w2_p, b2_p


@functools.partial(jax.jit, static_argnames=("hidden_dim", "tile_b"))
def shared_emotion_encoder(x, w1_p, b1_p, w2_p, b2_p, *, hidden_dim, tile_b=None):
    """x: (B, input_dim) f32 -> (B, hidden_dim) f32 = ReLU(ReLU(x@w1+b1)@w2+b2).

    w1_p/b1_p/w2_p/b2_p are the pre-padded, pre-cast params from prepare_params.
    """
    B, d_in = x.shape
    h_p = w1_p.shape[1]
    assert w1_p.shape == (d_in, h_p)
    assert w2_p.shape == (h_p, h_p)
    assert b1_p.shape == (1, h_p) and b2_p.shape == (1, h_p)
    assert hidden_dim <= h_p

    if tile_b is None:
        tile_b = _pick_tile_b(B, d_in, h_p)
    grid = (pl.cdiv(B, tile_b),)   # ragged last block handled by Pallas masking

    return pl.pallas_call(
        _encoder_kernel,
        out_shape=jax.ShapeDtypeStruct((B, hidden_dim), jnp.float32),
        grid_spec=pltpu.PrefetchScalarGridSpec(
            num_scalar_prefetch=0,
            grid=grid,
            in_specs=[
                # x: full (unpadded) feature dim, f32; cast to bf16 in-kernel.
                # TODO(synk): if the xprof trace shows exposed input DMA, sweep
                # pipeline_mode=pl.Buffered(3) on this spec.
                pl.BlockSpec((tile_b, d_in), lambda i: (i, 0)),
                pl.BlockSpec((d_in, h_p), lambda i: (0, 0)),   # w1 (resident)
                pl.BlockSpec((1, h_p), lambda i: (0, 0)),      # b1
                pl.BlockSpec((h_p, h_p), lambda i: (0, 0)),    # w2 (resident)
                pl.BlockSpec((1, h_p), lambda i: (0, 0)),      # b2
            ],
            out_specs=pl.BlockSpec((tile_b, hidden_dim), lambda i: (i, 0)),
        ),
        compiler_params=pltpu.CompilerParams(
            dimension_semantics=("parallel",),
            vmem_limit_bytes=_VMEM_LIMIT,
        ),
    )(x, w1_p, b1_p, w2_p, b2_p)


def _init_linear(key, fan_in, fan_out):
    # Deterministic init mimicking torch.nn.Linear default (uniform +/- 1/sqrt(fan_in)).
    kw, kb = jax.random.split(key)
    bound = 1.0 / jnp.sqrt(jnp.float32(fan_in))
    w = jax.random.uniform(kw, (fan_in, fan_out), jnp.float32, -bound, bound)
    b = jax.random.uniform(kb, (fan_out,), jnp.float32, -bound, bound)
    return w, b


def _reference(x, w1, b1, w2, b2):
    # Same bf16-operand / f32-accumulate math as the kernel, in plain JAX.
    xb = x.astype(jnp.bfloat16)
    h = jnp.maximum(
        jnp.dot(xb, w1.astype(jnp.bfloat16), preferred_element_type=jnp.float32) + b1,
        0.0)
    return jnp.maximum(
        jnp.dot(h.astype(jnp.bfloat16), w2.astype(jnp.bfloat16),
                preferred_element_type=jnp.float32) + b2,
        0.0)


if __name__ == "__main__":
    key = jax.random.PRNGKey(0)
    k_x, k_l1, k_l2 = jax.random.split(key, 3)

    batch = 37          # not a multiple of the tile: exercises the ragged last block
    input_dim = 96      # not a multiple of 128: x is fed unpadded (K < 128 on the MXU)
    hidden_dim = 256    # module default; lane-dense output

    x = jax.random.normal(k_x, (batch, input_dim), jnp.float32)
    w1, b1 = _init_linear(k_l1, input_dim, hidden_dim)
    w2, b2 = _init_linear(k_l2, hidden_dim, hidden_dim)

    params = prepare_params(w1, b1, w2, b2)          # one-time weight pad/cast
    out = shared_emotion_encoder(x, *params, hidden_dim=hidden_dim)
    out = jax.block_until_ready(out)
    assert out.shape == (batch, hidden_dim)
    assert out.dtype == jnp.float32

    ref = _reference(x, w1, b1, w2, b2)
    max_diff = float(jnp.max(jnp.abs(out - ref)))
    assert jnp.allclose(out, ref, atol=2e-4, rtol=2e-3), (
        "max abs diff = %g" % max_diff)

    print("KERNEL_OK")
</pallas_src>

<mosaic_0001>
module attributes {stable_mosaic.version = 11 : i64} {
  func.func @_encoder_kernel(%arg0: i32, %arg1: memref<48x96xf32, #tpu.memory_space<vmem>>, %arg2: memref<96x256xbf16, #tpu.memory_space<vmem>>, %arg3: memref<1x256xf32, #tpu.memory_space<vmem>>, %arg4: memref<256x256xbf16, #tpu.memory_space<vmem>>, %arg5: memref<1x256xf32, #tpu.memory_space<vmem>>, %arg6: memref<48x256xf32, #tpu.memory_space<vmem>>) attributes {dimension_semantics = [#tpu.dimension_semantics<parallel>], iteration_bounds = array<i64: 1>, scalar_prefetch = 0 : i64, scratch_operands = 0 : i64, tpu.core_type = #tpu.core_type<tc>, window_params = [{transform_indices = @transform_0, window_bounds = array<i64: 48, 96>}, {pipeline_mode = #tpu.pipeline_mode<synchronous>, transform_indices = @transform_1, window_bounds = array<i64: 96, 256>}, {pipeline_mode = #tpu.pipeline_mode<synchronous>, transform_indices = @transform_2, window_bounds = array<i64: 1, 256>}, {pipeline_mode = #tpu.pipeline_mode<synchronous>, transform_indices = @transform_3, window_bounds = array<i64: 256, 256>}, {pipeline_mode = #tpu.pipeline_mode<synchronous>, transform_indices = @transform_4, window_bounds = array<i64: 1, 256>}, {transform_indices = @transform_5, window_bounds = array<i64: 48, 256>}]} {
    %c0 = arith.constant 0 : index
    %c0_0 = arith.constant 0 : index
    %0 = vector.load %arg1[%c0, %c0_0] : memref<48x96xf32, #tpu.memory_space<vmem>>, vector<48x96xf32>
    %1 = arith.truncf %0 : vector<48x96xf32> to vector<48x96xbf16>
    %c0_1 = arith.constant 0 : index
    %c0_2 = arith.constant 0 : index
    %2 = vector.load %arg2[%c0_1, %c0_2] : memref<96x256xbf16, #tpu.memory_space<vmem>>, vector<96x256xbf16>
    %cst = arith.constant dense<0.000000e+00> : vector<48x256xf32>
    %3 = tpu.matmul %1, %2, %cst {dimension_numbers = #tpu.dot_dimension_numbers<[1], [0], [0], [1], [0, 0, 1, 1], [], []>} : vector<48x96xbf16>, vector<96x256xbf16>, vector<48x256xf32> -> vector<48x256xf32>
    %c0_3 = arith.constant 0 : index
    %c0_4 = arith.constant 0 : index
    %4 = vector.load %arg3[%c0_3, %c0_4] : memref<1x256xf32, #tpu.memory_space<vmem>>, vector<1x256xf32>
    %5 = vector.broadcast %4 : vector<1x256xf32> to vector<48x256xf32>
    %6 = arith.addf %3, %5 : vector<48x256xf32>
    %cst_5 = arith.constant 0.000000e+00 : f32
    %7 = vector.broadcast %cst_5 : f32 to vector<48x256xf32>
    %8 = arith.maximumf %6, %7 : vector<48x256xf32>
    %9 = arith.truncf %8 : vector<48x256xf32> to vector<48x256xbf16>
    %c0_6 = arith.constant 0 : index
    %c0_7 = arith.constant 0 : index
    %10 = vector.load %arg4[%c0_6, %c0_7] : memref<256x256xbf16, #tpu.memory_space<vmem>>, vector<256x256xbf16>
    %cst_8 = arith.constant dense<0.000000e+00> : vector<48x256xf32>
    %11 = tpu.matmul %9, %10, %cst_8 {dimension_numbers = #tpu.dot_dimension_numbers<[1], [0], [0], [1], [0, 0, 1, 1], [], []>} : vector<48x256xbf16>, vector<256x256xbf16>, vector<48x256xf32> -> vector<48x256xf32>
    %c0_9 = arith.constant 0 : index
    %c0_10 = arith.constant 0 : index
    %12 = vector.load %arg5[%c0_9, %c0_10] : memref<1x256xf32, #tpu.memory_space<vmem>>, vector<1x256xf32>
    %13 = vector.broadcast %12 : vector<1x256xf32> to vector<48x256xf32>
    %14 = arith.addf %11, %13 : vector<48x256xf32>
    %cst_11 = arith.constant 0.000000e+00 : f32
    %15 = vector.broadcast %cst_11 : f32 to vector<48x256xf32>
    %16 = arith.maximumf %14, %15 : vector<48x256xf32>
    %c0_12 = arith.constant 0 : index
    %c0_13 = arith.constant 0 : index
    %17 = vector.load %arg6[%c0_12, %c0_13] : memref<48x256xf32, #tpu.memory_space<vmem>>, vector<48x256xf32>
    tpu.vector_store %arg6[%c0_12, %c0_13], %16 {strides = array<i32>} : memref<48x256xf32, #tpu.memory_space<vmem>>, vector<48x256xf32>,
    return
  }
  func.func @transform_0(%arg0: i32) -> (i32, i32) {
    %c0_i32 = arith.constant 0 : i32
    %c0_i32_0 = arith.constant 0 : i32
    return %arg0, %c0_i32 : i32, i32
  }
  func.func @transform_1(%arg0: i32) -> (i32, i32) {
    %c0_i32 = arith.constant 0 : i32
    %c0_i32_0 = arith.constant 0 : i32
    %c0_i32_1 = arith.constant 0 : i32
    return %c0_i32, %c0_i32_0 : i32, i32
  }
  func.func @transform_2(%arg0: i32) -> (i32, i32) {
    %c0_i32 = arith.constant 0 : i32
    %c0_i32_0 = arith.constant 0 : i32
    %c0_i32_1 = arith.constant 0 : i32
    return %c0_i32, %c0_i32_0 : i32, i32
  }
  func.func @transform_3(%arg0: i32) -> (i32, i32) {
    %c0_i32 = arith.constant 0 : i32
    %c0_i32_0 = arith.constant 0 : i32
    %c0_i32_1 = arith.constant 0 : i32
    return %c0_i32, %c0_i32_0 : i32, i32
  }
  func.func @transform_4(%arg0: i32) -> (i32, i32) {
    %c0_i32 = arith.constant 0 : i32
    %c0_i32_0 = arith.constant 0 : i32
    %c0_i32_1 = arith.constant 0 : i32
    return %c0_i32, %c0_i32_0 : i32, i32
  }
  func.func @transform_5(%arg0: i32) -> (i32, i32) {
    %c0_i32 = arith.constant 0 : i32
    %c0_i32_0 = arith.constant 0 : i32
    return %arg0, %c0_i32 : i32, i32
  }
}

</mosaic_0001>

<llo_original>
// kernel: shared_emotion_encoder.1
$region0: #{shared_emotion_encoder.1}
  #allocation0 [shape = 'u32[]', space=smem, size = 0x4, offset = 0x4, fixed_abs, tag = 'smem constant byte address 0x4 - core index']
  #allocation1 [shape = 'u32[72,128]{1,0:T(1,128)}', space=vmem, size = 0x9000, scoped, tag = 'internal scratch']
  %s0 = inlined_call_operand.hbm [shape: f32[37,96], index: 0, kind: input, shape index: {}]
  %s1 = inlined_call_operand.hbm [shape: bf16[96,256], index: 1, kind: input, shape index: {}]
  %s2 = inlined_call_operand.hbm [shape: f32[1,256], index: 2, kind: input, shape index: {}]
  %s3 = inlined_call_operand.hbm [shape: bf16[256,256], index: 3, kind: input, shape index: {}]
  %s4 = inlined_call_operand.vmem [shape: f32[1,256], index: 4, kind: input, shape index: {}]
  %s5 = inlined_call_operand.hbm [shape: f32[37,256], index: 5, kind: output, shape index: {}]
  %s6 = sld [smem:[#allocation0]]
  $region46: #{shared_emotion_encoder.1} parent=0
    _
  %s8 = ssub.s32 1, %s6
  %s9 = scalar_select 0, %s8, %s6
  $region1: #{shared_emotion_encoder.1} parent=0
    #allocation2 [shape = 'u8[24576]{0}', space=vmem, size = 0x6000, scoped, tag = 'input window, operand 0, single buffered']
    #allocation3 [shape = 's32[1]{0}', space=sflag, size = 0x4, scoped, tag = 'scoped memory for shared_emotion_encoder.1']
    #allocation4 [shape = 's32[1]{0}', space=sflag, size = 0x4, scoped, tag = 'scoped memory for shared_emotion_encoder.1']
    #allocation5 [shape = 'u8[49152]{0}', space=vmem, size = 0xc000, scoped, tag = 'input window, operand 1, single buffered']
    #allocation6 [shape = 's32[1]{0}', space=sflag, size = 0x4, scoped, tag = 'scoped memory for shared_emotion_encoder.1']
    #allocation7 [shape = 'u8[1024]{0}', space=vmem, size = 0x400, scoped, tag = 'input window, operand 2, single buffered']
    #allocation8 [shape = 'u8[131072]{0}', space=vmem, size = 0x20000, scoped, tag = 'input window, operand 3, single buffered']
    #allocation9 [shape = 's32[1]{0}', space=sflag, size = 0x4, scoped, tag = 'scoped memory for shared_emotion_encoder.1']
    #allocation10 [shape = 'u8[49152]{0}', space=vmem, size = 0xc000, scoped, tag = 'output window, operand 0, single buffered']
    %10 = vsyncpa [#allocation3], 0
    %11 = vsyncpa [#allocation6], 0
    %12 = vsyncpa [#allocation9], 0
    %13 = vsyncpa [#allocation4], 0
    // Predicated region
    $region2: #{shared_emotion_encoder.1} parent=1 // pred_check
      _
    $region3: #{shared_emotion_encoder.1} parent=1 // pred_check_branch
      %15 = sbr.rel (0) target = $region5
    $region4: #{shared_emotion_encoder.1} parent=1 // pred_region
      %17 = vsyncadd [#allocation3], 128
      %s18 = sshll.u32 %s0, 4
      %s19 = int_to_ptr.hbm [resolvable:$true] %s18
      %s20 = sshll.u32 [#allocation2], 4
      %s21 = int_to_ptr.vmem [resolvable:$true] %s20
      %26 = dma.hbm_to_vmem [thread:$0]  %s19, 640, %s21, [#allocation3], 128, 128, 8
    $region5: #{shared_emotion_encoder.1} parent=1 // pred_fallthru
      _
    // Predicated region
    $region6: #{shared_emotion_encoder.1} parent=1 // pred_check
      _
    $region7: #{shared_emotion_encoder.1} parent=1 // pred_check_branch
      %28 = sbr.rel (0) target = $region9
    $region8: #{shared_emotion_encoder.1} parent=1 // pred_region
      %30 = vsyncadd [#allocation6], 0
      %s31 = sshll.u32 %s1, 4
      %s32 = int_to_ptr.hbm [resolvable:$true] %s31
      %s33 = sshll.u32 [#allocation5], 4
      %s34 = int_to_ptr.vmem [resolvable:$true] %s33
      %39 = dma.hbm_to_vmem [thread:$0]  %s32, 1536, %s34, [#allocation6], 128, 128, 8
    $region9: #{shared_emotion_encoder.1} parent=1 // pred_fallthru
      _
    // Predicated region
    $region10: #{shared_emotion_encoder.1} parent=1 // pred_check
      _
    $region11: #{shared_emotion_encoder.1} parent=1 // pred_check_branch
      %41 = sbr.rel (0) target = $region13
    $region12: #{shared_emotion_encoder.1} parent=1 // pred_region
      %43 = vsyncadd [#allocation6], 0
      %s45 = sshll.u32 %s2, 4
      %s46 = int_to_ptr.hbm [resolvable:$true] %s45
      %s47 = sshll.u32 [#allocation7], 4
      %s48 = int_to_ptr.vmem [resolvable:$true] %s47
      %50 = dma.hbm_to_vmem [thread:$0]  %s46, 32, %s48, [#allocation6]
    $region13: #{shared_emotion_encoder.1} parent=1 // pred_fallthru
      _
    // Predicated region
    $region14: #{shared_emotion_encoder.1} parent=1 // pred_check
      _
    $region15: #{shared_emotion_encoder.1} parent=1 // pred_check_branch
      %52 = sbr.rel (0) target = $region17
    $region16: #{shared_emotion_encoder.1} parent=1 // pred_region
      %54 = vsyncadd [#allocation9], 0
      %s55 = sshll.u32 %s3, 4
      %s56 = int_to_ptr.hbm [resolvable:$true] %s55
      %s57 = sshll.u32 [#allocation8], 4
      %s58 = int_to_ptr.vmem [resolvable:$true] %s57
      %63 = dma.hbm_to_vmem [thread:$0]  %s56, 4096, %s58, [#allocation9], 128, 128, 8
    $region17: #{shared_emotion_encoder.1} parent=1 // pred_fallthru
      _
    // Predicated region
    $region18: #{shared_emotion_encoder.1} parent=1 // pred_check
      _
    $region19: #{shared_emotion_encoder.1} parent=1 // pred_check_branch
      %65 = sbr.rel (0) target = $region21
    $region20: #{shared_emotion_encoder.1} parent=1 // pred_region
      _
    $region21: #{shared_emotion_encoder.1} parent=1 // pred_fallthru
      _
    // Predicated region
    $region22: #{shared_emotion_encoder.1} parent=1 // pred_check
      _
    $region23: #{shared_emotion_encoder.1} parent=1 // pred_check_branch
      %67 = sbr.rel (0) target = $region25
    $region24: #{shared_emotion_encoder.1} parent=1 // pred_region
      %69 = dma.done [#allocation3], 768
    $region25: #{shared_emotion_encoder.1} parent=1 // pred_fallthru
      _
    // Predicated region
    $region26: #{shared_emotion_encoder.1} parent=1 // pred_check
      _
    $region27: #{shared_emotion_encoder.1} parent=1 // pred_check_branch
      %71 = sbr.rel (0) target = $region29
    $region28: #{shared_emotion_encoder.1} parent=1 // pred_region
      %73 = dma.done [#allocation6], 1536
    $region29: #{shared_emotion_encoder.1} parent=1 // pred_fallthru
      _
    // Predicated region
    $region30: #{shared_emotion_encoder.1} parent=1 // pred_check
      _
    $region31: #{shared_emotion_encoder.1} parent=1 // pred_check_branch
      %75 = sbr.rel (0) target = $region33
    $region32: #{shared_emotion_encoder.1} parent=1 // pred_region
      %77 = dma.done [#allocation6], 32
    $region33: #{shared_emotion_encoder.1} parent=1 // pred_fallthru
      _
    // Predicated region
    $region34: #{shared_emotion_encoder.1} parent=1 // pred_check
      _
    $region35: #{shared_emotion_encoder.1} parent=1 // pred_check_branch
      %79 = sbr.rel (0) target = $region37
    $region36: #{shared_emotion_encoder.1} parent=1 // pred_region
      %81 = dma.done [#allocation9], 4096
    $region37: #{shared_emotion_encoder.1} parent=1 // pred_fallthru
      _
    %v83 = vld [vmem:[#allocation2] sm:$0xff]
    %v84 = vld [vmem:[#allocation2 + $0x8] sm:$0xff]
    %v85 = vld [vmem:[#allocation2 + $0x10] sm:$0xff]
    %v86 = vld [vmem:[#allocation2 + $0x18] sm:$0xff]
    %v87 = vld [vmem:[#allocation2 + $0x20] sm:$0xff]
    %v88 = vld [vmem:[#allocation2 + $0x28] sm:$0xff]
    %v89 = vpack.c.bf16 %v84, %v83
    %v90 = vpack.c.bf16 %v86, %v85
    %v91 = vpack.c.bf16 %v88, %v87
    %v92 = vld [vmem:[#allocation5] sm:$0xff]
    %v93 = vld [vmem:[#allocation5 + $0x8] sm:$0xff]
    %v94 = vld [vmem:[#allocation5 + $0x10] sm:$0xff]
    %v95 = vld [vmem:[#allocation5 + $0x18] sm:$0xff]
    %v96 = vld [vmem:[#allocation5 + $0x20] sm:$0xff]
    %v97 = vld [vmem:[#allocation5 + $0x28] sm:$0xff]
    %v98 = vld [vmem:[#allocation5 + $0x30] sm:$0xff]
    %v99 = vld [vmem:[#allocation5 + $0x38] sm:$0xff]
    %v100 = vld [vmem:[#allocation5 + $0x40] sm:$0xff]
    %v101 = vld [vmem:[#allocation5 + $0x48] sm:$0xff]
    %v102 = vld [vmem:[#allocation5 + $0x50] sm:$0xff]
    %v103 = vld [vmem:[#allocation5 + $0x58] sm:$0xff]
    %v104 = vld [vmem:[#allocation7] sm:$0x3]
    %v106 = vperm.slane %v104, 0
    %v107 = vperm.slane %v104, 1
    %v122 = vunpack.c.l.b16 %v92
    %v123 = vunpack.c.h.b16 %v92
    %v124 = vunpack.c.l.b16 %v93
    %v125 = vunpack.c.h.b16 %v93
    %v126 = vunpack.c.l.b16 %v94
    %v127 = vunpack.c.h.b16 %v94
    %v128 = vunpack.c.l.b16 %v95
    %v129 = vunpack.c.h.b16 %v95
    %v130 = vunpack.c.l.b16 %v96
    %v131 = vunpack.c.h.b16 %v96
    %v132 = vunpack.c.l.b16 %v97
    %v133 = vunpack.c.h.b16 %v97
    %v134 = vunpack.c.l.b16 %v98
    %v135 = vunpack.c.h.b16 %v98
    %v136 = vunpack.c.l.b16 %v99
    %v137 = vunpack.c.h.b16 %v99
    %v138 = vunpack.c.l.b16 %v100
    %v139 = vunpack.c.h.b16 %v100
    %v140 = vunpack.c.l.b16 %v101
    %v141 = vunpack.c.h.b16 %v101
    %v142 = vunpack.c.l.b16 %v102
    %v143 = vunpack.c.h.b16 %v102
    %v144 = vunpack.c.l.b16 %v103
    %v145 = vunpack.c.h.b16 %v103
    %v146 = vpack.c.b16 %v124, %v122
    %v147 = vpack.c.b16 %v125, %v123
    %v148 = vpack.c.b16 %v128, %v126
    %v149 = vpack.c.b16 %v129, %v127
    %v150 = vpack.c.b16 %v132, %v130
    %v151 = vpack.c.b16 %v133, %v131
    %v152 = vpack.c.b16 %v136, %v134
    %v153 = vpack.c.b16 %v137, %v135
    %v154 = vpack.c.b16 %v140, %v138
    %v155 = vpack.c.b16 %v141, %v139
    %v156 = vpack.c.b16 %v144, %v142
    %v157 = vpack.c.b16 %v145, %v143
    %vm170 = vcmask 785408
    %v172 = vsel %vm170, %v89, 0
    %v175 = vsel %vm170, %v90, 0
    %v178 = vsel %vm170, %v91, 0
    %180 = vmatpush.bf16.msra.mxu0 0
    %181 = vmatpush.bf16.msra.mxu0 0
    %182 = vmatpush.bf16.msra.mxu0 %v156
    %183 = vmatpush.bf16.msra.mxu0 %v154
    %184 = vmatpush.bf16.msra.mxu0 %v152
    %185 = vmatpush.bf16.msra.mxu0 %v150
    %186 = vmatpush.bf16.msra.mxu0 %v148
    %187 = vmatpush.bf16.msra.mxu0 %v146
    %188 = vmatmul.bf16.gmra.mxu0 %v172
    %v189 = vpop.f32.mrf.mxu0
    %v190 = vadd.f32 %v106, %v189
    %v191 = vpop.f32.mrf.mxu0
    %v192 = vadd.f32 %v106, %v191
    %193 = vmatmul.bf16.gmra.mxu0 %v175
    %v194 = vpop.f32.mrf.mxu0
    %v195 = vadd.f32 %v106, %v194
    %v196 = vpop.f32.mrf.mxu0
    %v197 = vadd.f32 %v106, %v196
    %198 = vmatmul.bf16.gmra.mxu0 %v178
    %v199 = vpop.f32.mrf.mxu0
    %v200 = vadd.f32 %v106, %v199
    %v201 = vpop.f32.mrf.mxu0
    %v202 = vadd.f32 %v106, %v201
    %203 = vdwg.mxu0
    %204 = vmatpush.bf16.msra.mxu0 0
    %205 = vmatpush.bf16.msra.mxu0 0
    %206 = vmatpush.bf16.msra.mxu0 %v157
    %207 = vmatpush.bf16.msra.mxu0 %v155
    %208 = vmatpush.bf16.msra.mxu0 %v153
    %209 = vmatpush.bf16.msra.mxu0 %v151
    %210 = vmatpush.bf16.msra.mxu0 %v149
    %211 = vmatpush.bf16.msra.mxu0 %v147
    %212 = vmatmul.bf16.gmra.mxu0 %v172
    %v213 = vpop.f32.mrf.mxu0
    %v214 = vadd.f32 %v107, %v213
    %v215 = vpop.f32.mrf.mxu0
    %v216 = vadd.f32 %v107, %v215
    %217 = vmatmul.bf16.gmra.mxu0 %v175
    %v218 = vpop.f32.mrf.mxu0
    %v219 = vadd.f32 %v107, %v218
    %v220 = vpop.f32.mrf.mxu0
    %v221 = vadd.f32 %v107, %v220
    %222 = vmatmul.bf16.gmra.mxu0 %v178
    %v223 = vpop.f32.mrf.mxu0
    %v224 = vadd.f32 %v107, %v223
    %v225 = vpop.f32.mrf.mxu0
    %v226 = vadd.f32 %v107, %v225
    %227 = vdwg.mxu0
    %v228 = vmax.f32 %v190, 0.0
    %v229 = vmax.f32 %v214, 0.0
    %v230 = vmax.f32 %v192, 0.0
    %v231 = vmax.f32 %v216, 0.0
    %v232 = vmax.f32 %v195, 0.0
    %v233 = vmax.f32 %v219, 0.0
    %v234 = vmax.f32 %v197, 0.0
    %v235 = vmax.f32 %v221, 0.0
    %v236 = vmax.f32 %v200, 0.0
    %v237 = vmax.f32 %v224, 0.0
    %v238 = vmax.f32 %v202, 0.0
    %v239 = vmax.f32 %v226, 0.0
    %v240 = vpack.c.bf16 %v230, %v228
    %v241 = vpack.c.bf16 %v231, %v229
    %v242 = vpack.c.bf16 %v234, %v232
    %v243 = vpack.c.bf16 %v235, %v233
    %v244 = vpack.c.bf16 %v238, %v236
    %v245 = vpack.c.bf16 %v239, %v237
    %v246 = vld [vmem:[#allocation8] sm:$0xff]
    %v247 = vld [vmem:[#allocation8 + $0x8] sm:$0xff]
    %v248 = vld [vmem:[#allocation8 + $0x10] sm:$0xff]
    %v249 = vld [vmem:[#allocation8 + $0x18] sm:$0xff]
    %v250 = vld [vmem:[#allocation8 + $0x20] sm:$0xff]
    %v251 = vld [vmem:[#allocation8 + $0x28] sm:$0xff]
    %v252 = vld [vmem:[#allocation8 + $0x30] sm:$0xff]
    %v253 = vld [vmem:[#allocation8 + $0x38] sm:$0xff]
    %v254 = vld [vmem:[#allocation8 + $0x40] sm:$0xff]
    %v255 = vld [vmem:[#allocation8 + $0x48] sm:$0xff]
    %v256 = vld [vmem:[#allocation8 + $0x50] sm:$0xff]
    %v257 = vld [vmem:[#allocation8 + $0x58] sm:$0xff]
    %v258 = vld [vmem:[#allocation8 + $0x60] sm:$0xff]
    %v259 = vld [vmem:[#allocation8 + $0x68] sm:$0xff]
    %v260 = vld [vmem:[#allocation8 + $0x70] sm:$0xff]
    %v261 = vld [vmem:[#allocation8 + $0x78] sm:$0xff]
    %v262 = vld [vmem:[#allocation8 + $0x80] sm:$0xff]
    %v263 = vld [vmem:[#allocation8 + $0x88] sm:$0xff]
    %v264 = vld [vmem:[#allocation8 + $0x90] sm:$0xff]
    %v265 = vld [vmem:[#allocation8 + $0x98] sm:$0xff]
    %v266 = vld [vmem:[#allocation8 + $0xa0] sm:$0xff]
    %v267 = vld [vmem:[#allocation8 + $0xa8] sm:$0xff]
    %v268 = vld [vmem:[#allocation8 + $0xb0] sm:$0xff]
    %v269 = vld [vmem:[#allocation8 + $0xb8] sm:$0xff]
    %v270 = vld [vmem:[#allocation8 + $0xc0] sm:$0xff]
    %v271 = vld [vmem:[#allocation8 + $0xc8] sm:$0xff]
    %v272 = vld [vmem:[#allocation8 + $0xd0] sm:$0xff]
    %v273 = vld [vmem:[#allocation8 + $0xd8] sm:$0xff]
    %v274 = vld [vmem:[#allocation8 + $0xe0] sm:$0xff]
    %v275 = vld [vmem:[#allocation8 + $0xe8] sm:$0xff]
    %v276 = vld [vmem:[#allocation8 + $0xf0] sm:$0xff]
    %v277 = vld [vmem:[#allocation8 + $0xf8] sm:$0xff]
    %v278 = vld [vmem:[%s4] sm:$0x3]
    %v280 = vperm.slane %v278, 0
    %v281 = vperm.slane %v278, 1
    %v316 = vunpack.c.l.b16 %v246
    %v317 = vunpack.c.h.b16 %v246
    %v318 = vunpack.c.l.b16 %v247
    %v319 = vunpack.c.h.b16 %v247
    %v320 = vunpack.c.l.b16 %v248
    %v321 = vunpack.c.h.b16 %v248
    %v322 = vunpack.c.l.b16 %v249
    %v323 = vunpack.c.h.b16 %v249
    %v324 = vunpack.c.l.b16 %v250
    %v325 = vunpack.c.h.b16 %v250
    %v326 = vunpack.c.l.b16 %v251
    %v327 = vunpack.c.h.b16 %v251
    %v328 = vunpack.c.l.b16 %v252
    %v329 = vunpack.c.h.b16 %v252
    %v330 = vunpack.c.l.b16 %v253
    %v331 = vunpack.c.h.b16 %v253
    %v332 = vunpack.c.l.b16 %v254
    %v333 = vunpack.c.h.b16 %v254
    %v334 = vunpack.c.l.b16 %v255
    %v335 = vunpack.c.h.b16 %v255
    %v336 = vunpack.c.l.b16 %v256
    %v337 = vunpack.c.h.b16 %v256
    %v338 = vunpack.c.l.b16 %v257
    %v339 = vunpack.c.h.b16 %v257
    %v340 = vunpack.c.l.b16 %v258
    %v341 = vunpack.c.h.b16 %v258
    %v342 = vunpack.c.l.b16 %v259
    %v343 = vunpack.c.h.b16 %v259
    %v344 = vunpack.c.l.b16 %v260
    %v345 = vunpack.c.h.b16 %v260
    %v346 = vunpack.c.l.b16 %v261
    %v347 = vunpack.c.h.b16 %v261
    %v348 = vunpack.c.l.b16 %v262
    %v349 = vunpack.c.h.b16 %v262
    %v350 = vunpack.c.l.b16 %v263
    %v351 = vunpack.c.h.b16 %v263
    %v352 = vunpack.c.l.b16 %v264
    %v353 = vunpack.c.h.b16 %v264
    %v354 = vunpack.c.l.b16 %v265
    %v355 = vunpack.c.h.b16 %v265
    %v356 = vunpack.c.l.b16 %v266
    %v357 = vunpack.c.h.b16 %v266
    %v358 = vunpack.c.l.b16 %v267
    %v359 = vunpack.c.h.b16 %v267
    %v360 = vunpack.c.l.b16 %v268
    %v361 = vunpack.c.h.b16 %v268
    %v362 = vunpack.c.l.b16 %v269
    %v363 = vunpack.c.h.b16 %v269
    %v364 = vunpack.c.l.b16 %v270
    %v365 = vunpack.c.h.b16 %v270
    %v366 = vunpack.c.l.b16 %v271
    %v367 = vunpack.c.h.b16 %v271
    %v368 = vunpack.c.l.b16 %v272
    %v369 = vunpack.c.h.b16 %v272
    %v370 = vunpack.c.l.b16 %v273
    %v371 = vunpack.c.h.b16 %v273
    %v372 = vunpack.c.l.b16 %v274
    %v373 = vunpack.c.h.b16 %v274
    %v374 = vunpack.c.l.b16 %v275
    %v375 = vunpack.c.h.b16 %v275
    %v376 = vunpack.c.l.b16 %v276
    %v377 = vunpack.c.h.b16 %v276
    %v378 = vunpack.c.l.b16 %v277
    %v379 = vunpack.c.h.b16 %v277
    %v380 = vpack.c.b16 %v318, %v316
    %v381 = vpack.c.b16 %v319, %v317
    %v382 = vpack.c.b16 %v322, %v320
    %v383 = vpack.c.b16 %v323, %v321
    %v384 = vpack.c.b16 %v326, %v324
    %v385 = vpack.c.b16 %v327, %v325
    %v386 = vpack.c.b16 %v330, %v328
    %v387 = vpack.c.b16 %v331, %v329
    %v388 = vpack.c.b16 %v334, %v332
    %v389 = vpack.c.b16 %v335, %v333
    %v390 = vpack.c.b16 %v338, %v336
    %v391 = vpack.c.b16 %v339, %v337
    %v392 = vpack.c.b16 %v342, %v340
    %v393 = vpack.c.b16 %v343, %v341
    %v394 = vpack.c.b16 %v346, %v344
    %v395 = vpack.c.b16 %v347, %v345
    %v396 = vpack.c.b16 %v350, %v348
    %v397 = vpack.c.b16 %v351, %v349
    %v398 = vpack.c.b16 %v354, %v352
    %v399 = vpack.c.b16 %v355, %v353
    %v400 = vpack.c.b16 %v358, %v356
    %v401 = vpack.c.b16 %v359, %v357
    %v402 = vpack.c.b16 %v362, %v360
    %v403 = vpack.c.b16 %v363, %v361
    %v404 = vpack.c.b16 %v366, %v364
    %v405 = vpack.c.b16 %v367, %v365
    %v406 = vpack.c.b16 %v370, %v368
    %v407 = vpack.c.b16 %v371, %v369
    %v408 = vpack.c.b16 %v374, %v372
    %v409 = vpack.c.b16 %v375, %v373
    %v410 = vpack.c.b16 %v378, %v376
    %v411 = vpack.c.b16 %v379, %v377
    %444 = vmatpush.bf16.msra.mxu0 %v394
    %445 = vmatpush.bf16.msra.mxu0 %v392
    %446 = vmatpush.bf16.msra.mxu0 %v390
    %447 = vmatpush.bf16.msra.mxu0 %v388
    %448 = vmatpush.bf16.msra.mxu0 %v386
    %449 = vmatpush.bf16.msra.mxu0 %v384
    %450 = vmatpush.bf16.msra.mxu0 %v382
    %451 = vmatpush.bf16.msra.mxu0 %v380
    %452 = vmatmul.bf16.gmra.mxu0 %v240
    %v453 = vpop.f32.mrf.mxu0
    %v454 = vadd.f32 %v280, %v453
    %v455 = vpop.f32.mrf.mxu0
    %v456 = vadd.f32 %v280, %v455
    %457 = vmatmul.bf16.gmra.mxu0 %v242
    %v458 = vpop.f32.mrf.mxu0
    %v459 = vadd.f32 %v280, %v458
    %v460 = vpop.f32.mrf.mxu0
    %v461 = vadd.f32 %v280, %v460
    %462 = vmatmul.bf16.gmra.mxu0 %v244
    %v463 = vpop.f32.mrf.mxu0
    %v464 = vadd.f32 %v280, %v463
    %v465 = vpop.f32.mrf.mxu0
    %v466 = vadd.f32 %v280, %v465
    %467 = vdwg.mxu0
    %468 = vmatpush.bf16.msra.mxu0 %v410
    %469 = vmatpush.bf16.msra.mxu0 %v408
    %470 = vmatpush.bf16.msra.mxu0 %v406
    %471 = vmatpush.bf16.msra.mxu0 %v404
    %472 = vmatpush.bf16.msra.mxu0 %v402
    %473 = vmatpush.bf16.msra.mxu0 %v400
    %474 = vmatpush.bf16.msra.mxu0 %v398
    %475 = vmatpush.bf16.msra.mxu0 %v396
    %476 = vmatmul.bf16.gmra.mxu0 %v241
    %v477 = vpop.f32.mrf.mxu0
    %v478 = vadd.f32 %v454, %v477
    %v479 = vpop.f32.mrf.mxu0
    %v480 = vadd.f32 %v456, %v479
    %481 = vmatmul.bf16.gmra.mxu0 %v243
    %v482 = vpop.f32.mrf.mxu0
    %v483 = vadd.f32 %v459, %v482
    %v484 = vpop.f32.mrf.mxu0
    %v485 = vadd.f32 %v461, %v484
    %486 = vmatmul.bf16.gmra.mxu0 %v245
    %v487 = vpop.f32.mrf.mxu0
    %v488 = vadd.f32 %v464, %v487
    %v489 = vpop.f32.mrf.mxu0
    %v490 = vadd.f32 %v466, %v489
    %491 = vdwg.mxu0
    %492 = vmatpush.bf16.msra.mxu0 %v395
    %493 = vmatpush.bf16.msra.mxu0 %v393
    %494 = vmatpush.bf16.msra.mxu0 %v391
    %495 = vmatpush.bf16.msra.mxu0 %v389
    %496 = vmatpush.bf16.msra.mxu0 %v387
    %497 = vmatpush.bf16.msra.mxu0 %v385
    %498 = vmatpush.bf16.msra.mxu0 %v383
    %499 = vmatpush.bf16.msra.mxu0 %v381
    %500 = vmatmul.bf16.gmra.mxu0 %v240
    %v501 = vpop.f32.mrf.mxu0
    %v502 = vadd.f32 %v281, %v501
    %v503 = vpop.f32.mrf.mxu0
    %v504 = vadd.f32 %v281, %v503
    %505 = vmatmul.bf16.gmra.mxu0 %v242
    %v506 = vpop.f32.mrf.mxu0
    %v507 = vadd.f32 %v281, %v506
    %v508 = vpop.f32.mrf.mxu0
    %v509 = vadd.f32 %v281, %v508
    %510 = vmatmul.bf16.gmra.mxu0 %v244
    %v511 = vpop.f32.mrf.mxu0
    %v512 = vadd.f32 %v281, %v511
    %v513 = vpop.f32.mrf.mxu0
    %v514 = vadd.f32 %v281, %v513
    %515 = vdwg.mxu0
    %516 = vmatpush.bf16.msra.mxu0 %v411
    %517 = vmatpush.bf16.msra.mxu0 %v409
    %518 = vmatpush.bf16.msra.mxu0 %v407
    %519 = vmatpush.bf16.msra.mxu0 %v405
    %520 = vmatpush.bf16.msra.mxu0 %v403
    %521 = vmatpush.bf16.msra.mxu0 %v401
    %522 = vmatpush.bf16.msra.mxu0 %v399
    %523 = vmatpush.bf16.msra.mxu0 %v397
    %524 = vmatmul.bf16.gmra.mxu0 %v241
    %v525 = vpop.f32.mrf.mxu0
    %v526 = vadd.f32 %v502, %v525
    %v527 = vpop.f32.mrf.mxu0
    %v528 = vadd.f32 %v504, %v527
    %529 = vmatmul.bf16.gmra.mxu0 %v243
    %v530 = vpop.f32.mrf.mxu0
    %v531 = vadd.f32 %v507, %v530
    %v532 = vpop.f32.mrf.mxu0
    %v533 = vadd.f32 %v509, %v532
    %534 = vmatmul.bf16.gmra.mxu0 %v245
    %v535 = vpop.f32.mrf.mxu0
    %v536 = vadd.f32 %v512, %v535
    %v537 = vpop.f32.mrf.mxu0
    %v538 = vadd.f32 %v514, %v537
    %539 = vdwg.mxu0
    %v540 = vmax.f32 %v478, 0.0
    %v541 = vmax.f32 %v526, 0.0
    %v542 = vmax.f32 %v480, 0.0
    %v543 = vmax.f32 %v528, 0.0
    %v544 = vmax.f32 %v483, 0.0
    %v545 = vmax.f32 %v531, 0.0
    %v546 = vmax.f32 %v485, 0.0
    %v547 = vmax.f32 %v533, 0.0
    %v548 = vmax.f32 %v488, 0.0
    %v549 = vmax.f32 %v536, 0.0
    %v550 = vmax.f32 %v490, 0.0
    %v551 = vmax.f32 %v538, 0.0
    %552 = vst [vmem:[#allocation10] sm:$0xff] %v540
    %553 = vst [vmem:[#allocation10 + $0x8] sm:$0xff] %v541
    %554 = vst [vmem:[#allocation10 + $0x10] sm:$0xff] %v542
    %555 = vst [vmem:[#allocation10 + $0x18] sm:$0xff] %v543
    %556 = vst [vmem:[#allocation10 + $0x20] sm:$0xff] %v544
    %557 = vst [vmem:[#allocation10 + $0x28] sm:$0xff] %v545
    %558 = vst [vmem:[#allocation10 + $0x30] sm:$0xff] %v546
    %559 = vst [vmem:[#allocation10 + $0x38] sm:$0xff] %v547
    %560 = vst [vmem:[#allocation10 + $0x40] sm:$0xff] %v548
    %561 = vst [vmem:[#allocation10 + $0x48] sm:$0xff] %v549
    %562 = vst [vmem:[#allocation10 + $0x50] sm:$0xff] %v550
    %563 = vst [vmem:[#allocation10 + $0x58] sm:$0xff] %v551
    // Predicated region
    $region38: #{shared_emotion_encoder.1} parent=1 // pred_check
      _
    $region39: #{shared_emotion_encoder.1} parent=1 // pred_check_branch
      %565 = sbr.rel (0) target = $region41
    $region40: #{shared_emotion_encoder.1} parent=1 // pred_region
      %567 = vsyncadd [#allocation4], 256
      %s568 = sshll.u32 [#allocation10], 4
      %s569 = int_to_ptr.vmem [resolvable:$true] %s568
      %s570 = sshll.u32 %s5, 4
      %s571 = int_to_ptr.hbm [resolvable:$true] %s570
      %576 = dma.vmem_to_hbm [thread:$0]  %s569, 1280, %s571, [#allocation4], 256, 256, 16
    $region41: #{shared_emotion_encoder.1} parent=1 // pred_fallthru
      _
    // Predicated region
    $region42: #{shared_emotion_encoder.1} parent=1 // pred_check
      _
    $region43: #{shared_emotion_encoder.1} parent=1 // pred_check_branch
      %578 = sbr.rel (0) target = $region45
    $region44: #{shared_emotion_encoder.1} parent=1 // pred_region
      %580 = dma.done [#allocation4], 1536
    $region45: #{shared_emotion_encoder.1} parent=1 // pred_fallthru
      _
    %581 = vsyncpa [#allocation3], 1
    %582 = vsyncpa [#allocation6], 1
    %583 = vsyncpa [#allocation9], 1
    %584 = vsyncpa [#allocation4], 1

</llo_original>
